<compile_context>
chip_gen: v7x
topology: tpu7x:2x2x1
jax: 0.10.0
libtpu: 0.0.40
codegen_flags: <defaults>
</compile_context>

<pallas_src>
import jax
import jax.numpy as jnp
from jax.experimental import pallas as pl
from jax.experimental.pallas import tpu as pltpu


def _conv2d_up_kernel(sel_ref, x_ref, wc_ref, b_ref, o_ref, y_ref):
    """One batch element, one tile of output rows.

    sel_ref : (TH, KH*H)               bf16 one-hot H-upsample/pad/tap selector
    x_ref   : (1, H, W*C_in)           bf16 original (un-upsampled) input, folded
    wc_ref  : (KH, W*C_in, W_out*C_out) bf16 collapsed W-upsample+pad+conv weights
    b_ref   : (1, W_out*C_out)         f32 bias tiled along W_out
    o_ref   : (1, TH, W_out*C_out)     output tile, lane-dense
    y_ref   : (KH*H, W_out*C_out)      bf16 VMEM scratch: per-batch hoisted x @ Wc
    """
    t = pl.program_id(1)
    kh_sz = wc_ref.shape[0]
    h = x_ref.shape[1]

    # Hoisted once per batch element (row-tile axis is "arbitrary"):
    #   Y[kh*H:(kh+1)*H, :] = x @ Wc[kh]
    @pl.when(t == 0)
    def _():
        x = x_ref[0]                                            # (H, W*C_in)
        for kh in range(kh_sz):                                 # small, static
            y_ref[pl.ds(kh * h, h), :] = jnp.dot(
                x, wc_ref[kh],
                preferred_element_type=jnp.float32).astype(y_ref.dtype)

    # Per tile: ONE matmul = fused nearest H-upsample + zero H-pad + kh tap sum.
    acc = jnp.dot(sel_ref[...], y_ref[...],
                  preferred_element_type=jnp.float32)           # (TH, Wo*Co) f32
    o_ref[0] = (acc + b_ref[...]).astype(o_ref.dtype)


def _upsample_selector(out_len, in_len, ksize, scale, pad, dil):
    """sel[k, o, i] = 1 iff conv tap k at output position o reads source index i
    of the zero-padded, nearest-upsampled axis (0 if it lands in the padding)."""
    k = jnp.arange(ksize)[:, None, None]
    o = jnp.arange(out_len)[None, :, None]
    i = jnp.arange(in_len)[None, None, :]
    t = o + k * dil - pad
    sel = (t >= 0) & (t < in_len * scale) & (t // scale == i)
    return sel.astype(jnp.float32)


def _pick_row_tile(h_out, cap=128):
    """Largest row tile <= cap (a (128, 256) f32 accumulator is ~32 vregs)."""
    if h_out <= cap:
        return h_out                      # single full-dim tile per batch
    best = 0
    for th in range(8, cap + 1, 8):
        if h_out % th == 0:
            best = th
    return best if best else h_out        # fallback: full-dim block


def conv2d_up(x_nchw, weight, bias, *, scale_factor, padding, dilation=1):
    """Forward pass of Conv2dUp.

    x_nchw : (N, C_in, H, W) f32, weight : (C_out, C_in, KH, KW), bias : (C_out,)
    Returns (N, C_out, H_out, W_out).
    """
    n, c_in, h, w = x_nchw.shape
    c_out, c_in_w, kh, kw = weight.shape
    assert c_in == c_in_w, "groups != 1 not supported"   # TODO(synk): groups

    s, p, d = scale_factor, padding, dilation
    h_out = h * s + 2 * p - d * (kh - 1)
    w_out = w * s + 2 * p - d * (kw - 1)
    lanes_in = w * c_in
    lanes_out = w_out * c_out

    # ---- trace-time precomputation of the fused operands (plain JAX) --------
    # Input folded channels-last into the lane dim: (N, H, W*C_in), bf16.
    x_f = jnp.transpose(x_nchw, (0, 2, 3, 1)).reshape(n, h, lanes_in)
    x_f = x_f.astype(jnp.bfloat16)

    # H-direction selectors concatenated over kh along the contraction axis
    # (matches Y's kh-major row layout).  Values are exactly 0/1 -> bf16 exact.
    sel_h = _upsample_selector(h_out, h, kh, s, p, d)             # (KH, H_out, H)
    sel_cat = jnp.transpose(sel_h, (1, 0, 2)).reshape(h_out, kh * h)
    sel_cat = sel_cat.astype(jnp.bfloat16)

    # W-direction + (kw, ci) contraction collapsed into a banded weight:
    #   Wc[kh, iw*C_in+ci, ow*C_out+co] = sum_{kw hitting (iw, ow)} w[co,ci,kh,kw]
    mask_w = _upsample_selector(w_out, w, kw, s, p, d)            # (KW, W_out, W)
    w_t = jnp.transpose(weight, (2, 3, 1, 0))                     # (KH, KW, C_in, C_out)
    wc = jnp.einsum('koi,nkcf->nicof', mask_w, w_t,
                    precision=jax.lax.Precision.HIGHEST)          # (KH, W, C_in, W_out, C_out)
    wc = wc.reshape(kh, lanes_in, lanes_out).astype(jnp.bfloat16)

    b_row = jnp.tile(bias, w_out).reshape(1, lanes_out).astype(jnp.float32)

    th = _pick_row_tile(h_out)
    grid = (n, h_out // th)

    # ---- VMEM budget (explicit, v7x-portable) --------------------------------
    bf16_b, f32_b = 2, 4
    vmem_needed = (
        2 * th * (kh * h) * bf16_b            # sel tile (double-buffered)
        + 2 * h * lanes_in * bf16_b           # x slab   (double-buffered)
        + 2 * kh * lanes_in * lanes_out * bf16_b   # Wc (pipeline keeps 2 bufs)
        + 2 * lanes_out * f32_b               # bias
        + 2 * th * lanes_out * f32_b          # output tile (double-buffered)
        + kh * h * lanes_out * bf16_b         # Y scratch
    )
    vmem_limit = int(min(max(2 * vmem_needed, 32 << 20), 48 << 20))

    # Advisory cost so XLA can overlap the wrapper einsum/transposes with it.
    flops = (2 * n * kh * h * lanes_in * lanes_out           # hoisted x @ Wc
             + 2 * n * h_out * (kh * h) * lanes_out)         # per-tile sel @ Y
    bytes_accessed = (
        n * h * lanes_in * bf16_b
        + kh * lanes_in * lanes_out * bf16_b
        + n * h_out * (kh * h) * bf16_b
        + lanes_out * f32_b
        + n * h_out * lanes_out * f32_b
    )
    cost = pl.CostEstimate(flops=int(flops), transcendentals=0,
                           bytes_accessed=int(bytes_accessed))

    out_f = pl.pallas_call(
        _conv2d_up_kernel,
        out_shape=jax.ShapeDtypeStruct((n, h_out, lanes_out), x_nchw.dtype),
        grid_spec=pltpu.PrefetchScalarGridSpec(
            num_scalar_prefetch=0,
            grid=grid,
            in_specs=[
                pl.BlockSpec((th, kh * h), lambda b, t: (t, 0)),
                pl.BlockSpec((1, h, lanes_in), lambda b, t: (b, 0, 0)),
                pl.BlockSpec((kh, lanes_in, lanes_out), lambda b, t: (0, 0, 0)),
                pl.BlockSpec((1, lanes_out), lambda b, t: (0, 0)),
            ],
            out_specs=pl.BlockSpec((1, th, lanes_out), lambda b, t: (b, t, 0)),
            scratch_shapes=[pltpu.VMEM((kh * h, lanes_out), jnp.bfloat16)],
        ),
        compiler_params=pltpu.CompilerParams(
            # batch is 'parallel' (megacore-shardable on v7x); the row-tile axis
            # is 'arbitrary' because the Y scratch is reused across it.
            dimension_semantics=("parallel", "arbitrary"),
            vmem_limit_bytes=vmem_limit,
        ),
        cost_estimate=cost,
    )(sel_cat, x_f, wc, b_row)

    out = out_f.reshape(n, h_out, w_out, c_out)
    return jnp.transpose(out, (0, 3, 1, 2))                       # back to NCHW


def _reference(x_nchw, weight, bias, *, scale_factor, padding, dilation=1):
    """Pure-JAX f32 reference (upsample + lax.conv) for correctness checking."""
    x = jnp.repeat(jnp.repeat(x_nchw, scale_factor, axis=2), scale_factor, axis=3)
    out = jax.lax.conv_general_dilated(
        x, weight,
        window_strides=(1, 1),
        padding=((padding, padding), (padding, padding)),
        rhs_dilation=(dilation, dilation),
        dimension_numbers=("NCHW", "OIHW", "NCHW"),
    )
    return out + bias.reshape(1, -1, 1, 1)


if __name__ == "__main__":
    in_channels, out_channels = 4, 8
    kernel_size, stride, padding = 3, 2, 1

    key = jax.random.PRNGKey(0)
    kx, kw_, kb = jax.random.split(key, 3)

    x = jax.random.normal(kx, (2, in_channels, 16, 16), dtype=jnp.float32)
    weight = (
        jax.random.normal(kw_, (out_channels, in_channels, kernel_size, kernel_size),
                          dtype=jnp.float32)
        * (1.0 / (in_channels * kernel_size * kernel_size) ** 0.5)
    )
    bias = jax.random.normal(kb, (out_channels,), dtype=jnp.float32) * 0.1

    out = conv2d_up(x, weight, bias, scale_factor=stride, padding=padding, dilation=1)
    out = jax.block_until_ready(out)

    ref = _reference(x, weight, bias, scale_factor=stride, padding=padding, dilation=1)
    assert out.shape == ref.shape == (2, out_channels, 32, 32), out.shape
    # bf16 MXU operands (f32 accumulation) vs an all-f32 reference -> relaxed tol.
    assert jnp.allclose(out, ref, atol=1e-1, rtol=1e-1), float(jnp.abs(out - ref).max())

    print("KERNEL_OK")
</pallas_src>

<mosaic_0001>
module attributes {stable_mosaic.version = 11 : i64} {
  func.func @_conv2d_up_kernel(%arg0: i32, %arg1: i32, %arg2: memref<32x48xbf16, #tpu.memory_space<vmem>>, %arg3: memref<1x16x64xbf16, #tpu.memory_space<vmem>>, %arg4: memref<3x64x256xbf16, #tpu.memory_space<vmem>>, %arg5: memref<1x256xf32, #tpu.memory_space<vmem>>, %arg6: memref<1x32x256xf32, #tpu.memory_space<vmem>>, %arg7: memref<48x256xbf16, #tpu.memory_space<vmem>>) attributes {dimension_semantics = [#tpu.dimension_semantics<parallel>, #tpu.dimension_semantics<arbitrary>], iteration_bounds = array<i64: 2, 1>, scalar_prefetch = 0 : i64, scratch_operands = 1 : i64, tpu.core_type = #tpu.core_type<tc>, window_params = [{transform_indices = @transform_0, window_bounds = array<i64: 32, 48>}, {transform_indices = @transform_1, window_bounds = array<i64: 1, 16, 64>}, {pipeline_mode = #tpu.pipeline_mode<synchronous>, transform_indices = @transform_2, window_bounds = array<i64: 3, 64, 256>}, {pipeline_mode = #tpu.pipeline_mode<synchronous>, transform_indices = @transform_3, window_bounds = array<i64: 1, 256>}, {transform_indices = @transform_4, window_bounds = array<i64: 1, 32, 256>}]} {
    %c0_i32 = arith.constant 0 : i32
    %0 = arith.cmpi eq, %arg1, %c0_i32 : i32
    %1 = arith.extui %0 : i1 to i32
    %c0_i32_0 = arith.constant 0 : i32
    %2 = arith.cmpi ne, %1, %c0_i32_0 : i32
    scf.if %2 {
      %c0_9 = arith.constant 0 : index
      %c0_10 = arith.constant 0 : index
      %c0_11 = arith.constant 0 : index
      %12 = vector.load %arg3[%c0_9, %c0_10, %c0_11] : memref<1x16x64xbf16, #tpu.memory_space<vmem>>, vector<1x16x64xbf16>
      %13 = vector.shape_cast %12 : vector<1x16x64xbf16> to vector<16x64xbf16>
      %c0_12 = arith.constant 0 : index
      %c0_13 = arith.constant 0 : index
      %c0_14 = arith.constant 0 : index
      %14 = vector.load %arg4[%c0_12, %c0_13, %c0_14] : memref<3x64x256xbf16, #tpu.memory_space<vmem>>, vector<1x64x256xbf16>
      %15 = vector.shape_cast %14 : vector<1x64x256xbf16> to vector<64x256xbf16>
      %cst_15 = arith.constant dense<0.000000e+00> : vector<16x256xf32>
      %16 = tpu.matmul %13, %15, %cst_15 {dimension_numbers = #tpu.dot_dimension_numbers<[1], [0], [0], [1], [0, 0, 1, 1], [], []>} : vector<16x64xbf16>, vector<64x256xbf16>, vector<16x256xf32> -> vector<16x256xf32>
      %17 = arith.truncf %16 : vector<16x256xf32> to vector<16x256xbf16>
      %c0_16 = arith.constant 0 : index
      %c0_17 = arith.constant 0 : index
      %18 = vector.load %arg7[%c0_16, %c0_17] : memref<48x256xbf16, #tpu.memory_space<vmem>>, vector<16x256xbf16>
      tpu.vector_store %arg7[%c0_16, %c0_17], %17 {strides = array<i32>} : memref<48x256xbf16, #tpu.memory_space<vmem>>, vector<16x256xbf16>,
      %c1 = arith.constant 1 : index
      %c0_18 = arith.constant 0 : index
      %c0_19 = arith.constant 0 : index
      %19 = vector.load %arg4[%c1, %c0_18, %c0_19] : memref<3x64x256xbf16, #tpu.memory_space<vmem>>, vector<1x64x256xbf16>
      %20 = vector.shape_cast %19 : vector<1x64x256xbf16> to vector<64x256xbf16>
      %cst_20 = arith.constant dense<0.000000e+00> : vector<16x256xf32>
      %21 = tpu.matmul %13, %20, %cst_20 {dimension_numbers = #tpu.dot_dimension_numbers<[1], [0], [0], [1], [0, 0, 1, 1], [], []>} : vector<16x64xbf16>, vector<64x256xbf16>, vector<16x256xf32> -> vector<16x256xf32>
      %22 = arith.truncf %21 : vector<16x256xf32> to vector<16x256xbf16>
      %c16 = arith.constant 16 : index
      %c0_21 = arith.constant 0 : index
      %23 = vector.load %arg7[%c16, %c0_21] : memref<48x256xbf16, #tpu.memory_space<vmem>>, vector<16x256xbf16>
      tpu.vector_store %arg7[%c16, %c0_21], %22 {strides = array<i32>} : memref<48x256xbf16, #tpu.memory_space<vmem>>, vector<16x256xbf16>,
      %c2 = arith.constant 2 : index
      %c0_22 = arith.constant 0 : index
      %c0_23 = arith.constant 0 : index
      %24 = vector.load %arg4[%c2, %c0_22, %c0_23] : memref<3x64x256xbf16, #tpu.memory_space<vmem>>, vector<1x64x256xbf16>
      %25 = vector.shape_cast %24 : vector<1x64x256xbf16> to vector<64x256xbf16>
      %cst_24 = arith.constant dense<0.000000e+00> : vector<16x256xf32>
      %26 = tpu.matmul %13, %25, %cst_24 {dimension_numbers = #tpu.dot_dimension_numbers<[1], [0], [0], [1], [0, 0, 1, 1], [], []>} : vector<16x64xbf16>, vector<64x256xbf16>, vector<16x256xf32> -> vector<16x256xf32>
      %27 = arith.truncf %26 : vector<16x256xf32> to vector<16x256xbf16>
      %c32 = arith.constant 32 : index
      %c0_25 = arith.constant 0 : index
      %28 = vector.load %arg7[%c32, %c0_25] : memref<48x256xbf16, #tpu.memory_space<vmem>>, vector<16x256xbf16>
      tpu.vector_store %arg7[%c32, %c0_25], %27 {strides = array<i32>} : memref<48x256xbf16, #tpu.memory_space<vmem>>, vector<16x256xbf16>,
    } else {
    }
    %c0 = arith.constant 0 : index
    %c0_1 = arith.constant 0 : index
    %3 = vector.load %arg2[%c0, %c0_1] : memref<32x48xbf16, #tpu.memory_space<vmem>>, vector<32x48xbf16>
    %c0_2 = arith.constant 0 : index
    %c0_3 = arith.constant 0 : index
    %4 = vector.load %arg7[%c0_2, %c0_3] : memref<48x256xbf16, #tpu.memory_space<vmem>>, vector<48x256xbf16>
    %cst = arith.constant dense<0.000000e+00> : vector<32x256xf32>
    %5 = tpu.matmul %3, %4, %cst {dimension_numbers = #tpu.dot_dimension_numbers<[1], [0], [0], [1], [0, 0, 1, 1], [], []>} : vector<32x48xbf16>, vector<48x256xbf16>, vector<32x256xf32> -> vector<32x256xf32>
    %c0_4 = arith.constant 0 : index
    %c0_5 = arith.constant 0 : index
    %6 = vector.load %arg5[%c0_4, %c0_5] : memref<1x256xf32, #tpu.memory_space<vmem>>, vector<1x256xf32>
    %7 = vector.broadcast %6 : vector<1x256xf32> to vector<32x256xf32>
    %8 = arith.addf %5, %7 : vector<32x256xf32>
    %c0_6 = arith.constant 0 : index
    %c0_7 = arith.constant 0 : index
    %c0_8 = arith.constant 0 : index
    %9 = vector.load %arg6[%c0_6, %c0_7, %c0_8] : memref<1x32x256xf32, #tpu.memory_space<vmem>>, vector<1x32x256xf32>
    %10 = vector.shape_cast %9 : vector<1x32x256xf32> to vector<32x256xf32>
    %11 = vector.shape_cast %8 : vector<32x256xf32> to vector<1x32x256xf32>
    tpu.vector_store %arg6[%c0_6, %c0_7, %c0_8], %11 {strides = array<i32>} : memref<1x32x256xf32, #tpu.memory_space<vmem>>, vector<1x32x256xf32>,
    return
  }
  func.func @transform_0(%arg0: i32, %arg1: i32) -> (i32, i32) {
    %c0_i32 = arith.constant 0 : i32
    %c0_i32_0 = arith.constant 0 : i32
    return %arg1, %c0_i32 : i32, i32
  }
  func.func @transform_1(%arg0: i32, %arg1: i32) -> (i32, i32, i32) {
    %c0_i32 = arith.constant 0 : i32
    %c0_i32_0 = arith.constant 0 : i32
    %c0_i32_1 = arith.constant 0 : i32
    return %arg0, %c0_i32, %c0_i32_0 : i32, i32, i32
  }
  func.func @transform_2(%arg0: i32, %arg1: i32) -> (i32, i32, i32) {
    %c0_i32 = arith.constant 0 : i32
    %c0_i32_0 = arith.constant 0 : i32
    %c0_i32_1 = arith.constant 0 : i32
    %c0_i32_2 = arith.constant 0 : i32
    return %c0_i32, %c0_i32_0, %c0_i32_1 : i32, i32, i32
  }
  func.func @transform_3(%arg0: i32, %arg1: i32) -> (i32, i32) {
    %c0_i32 = arith.constant 0 : i32
    %c0_i32_0 = arith.constant 0 : i32
    %c0_i32_1 = arith.constant 0 : i32
    return %c0_i32, %c0_i32_0 : i32, i32
  }
  func.func @transform_4(%arg0: i32, %arg1: i32) -> (i32, i32, i32) {
    %c0_i32 = arith.constant 0 : i32
    %c0_i32_0 = arith.constant 0 : i32
    return %arg0, %arg1, %c0_i32 : i32, i32, i32
  }
}

</mosaic_0001>

<llo_original>
// kernel: tpu_custom_call.1
$region0: #{tpu_custom_call.1}
  #allocation0 [shape = 'u32[]', space=smem, size = 0x4, offset = 0x4, fixed_abs, tag = 'smem constant byte address 0x4 - core index']
  #allocation1 [shape = 'u32[144,128]{1,0:T(1,128)}', space=vmem, size = 0x12000, scoped, tag = 'internal scratch']
  #allocation2 [shape = 'bf16[48,256]{1,0:T(16,128)(2,1)}', space=vmem, size = 0x6000, scoped, tag = 'scratch operand']
  %s0 = inlined_call_operand.hbm [shape: bf16[32,48], index: 0, kind: input, shape index: {}]
  %s1 = inlined_call_operand.hbm [shape: bf16[2,16,64], index: 1, kind: input, shape index: {}]
  %s2 = inlined_call_operand.hbm [shape: bf16[3,64,256], index: 2, kind: input, shape index: {}]
  %s3 = inlined_call_operand.vmem [shape: f32[1,256], index: 3, kind: input, shape index: {}]
  %s4 = inlined_call_operand.hbm [shape: f32[2,32,256], index: 4, kind: output, shape index: {}]
  %s5 = sld [smem:[#allocation0]]
  $region65: #{tpu_custom_call.1} parent=0
    _
  %s7 = ssub.s32 1, %s5
  %s8 = scalar_select 0, %s7, %s5
  $region1: #{tpu_custom_call.1} parent=0
    #allocation3 [shape = 'u8[8192]{0}', space=vmem, size = 0x2000, scoped, tag = 'input window, operand 0, single buffered']
    #allocation4 [shape = 's32[2]{0}', space=sflag, size = 0x8, scoped, tag = 'scoped memory for tpu_custom_call.1']
    #allocation5 [shape = 's32[2]{0}', space=sflag, size = 0x8, scoped, tag = 'scoped memory for tpu_custom_call.1']
    #allocation6 [shape = 'u8[8192]{0}', space=vmem, size = 0x2000, scoped, tag = 'input window, operand 1']
    #allocation7 [shape = 's32[2]{0}', space=sflag, size = 0x8, scoped, tag = 'scoped memory for tpu_custom_call.1']
    #allocation8 [shape = 'u8[98304]{0}', space=vmem, size = 0x18000, scoped, tag = 'input window, operand 2, single buffered']
    #allocation9 [shape = 'u8[65536]{0}', space=vmem, size = 0x10000, scoped, tag = 'output window, operand 0']
    %9 = vsyncpa [#allocation4], 0
    %10 = vsyncpa [#allocation7], 0
    %s11 = scalar_lea.sflag [#allocation7], 1
    %12 = vsyncpa %s11, 0
    %13 = vsyncpa [#allocation5], 0
    %s14 = scalar_lea.sflag [#allocation5], 1
    %15 = vsyncpa %s14, 0
    loop: start=0, step=1, limit=4
    $region2: #{tpu_custom_call.1} parent=1 // loop_pre_header
      _
    $region3: #{tpu_custom_call.1} parent=1 // loop_header
      %s17 = sphi 0, %s21
      %p18 = scmp.ge.s32.totalorder %s17, 4
      %s24 = sphi 0, %s36
      %s25 = sphi 0, %s32
      %s26 = sphi 0, %s24
      %s27 = sphi 0, %s25
      %s28 = sphi 0, %s26
      %s29 = sphi 0, %s27
      %s39 = sphi 0, %s41
      %s42 = sphi 0, %s39
      %s43 = sphi 0, %s42
      %s59 = sphi 0, %s43
      %s65 = sphi 0, %s67
      %s68 = sphi 0, %s65
      %s69 = sphi 0, %s68
      %s85 = sphi 0, %s69
      %s89 = sphi 0, %s89
      %s91 = sphi 0, %s89
      %s92 = sphi 0, %s91
      %s106 = sphi 0, %s92
      %s110 = sphi 0, %s110
      %s112 = sphi 0, %s110
      %s113 = sphi 0, %s112
      %s127 = sphi 0, %s113
      %s135 = sphi 0, %s137
      %s138 = sphi 0, %s135
      %s139 = sphi 0, %s138
      %s155 = sphi 0, %s139
    $region4: #{tpu_custom_call.1} parent=1 // loop_header_branch
      %20 = sbr.rel (%p18) target = $region8
    $region5: #{tpu_custom_call.1} parent=1 // loop_body
      %s22 = ssub.s32 %s17, 1
      %s23 = ssub.s32 %s17, 2
      %s30 = sadd.s32 1, %s25
      %p31 = scmp.ge.s32.totalorder %s30, 1
      %s32 = scalar_select %p31, 0, %s30
      %s33 = sadd.s32 1, %s24
      %s34 = scalar_select %p31, %s33, %s24
      %p35 = scmp.ge.s32.totalorder %s34, 2
      %s36 = scalar_select %p35, 0, %s34
      %s37 = ssub.s32 %s25, %s32
      %p38 = scmp.eq.s32.totalorder %s37, 0
      %s40 = sadd.s32 %s39, 1
      %s41 = scalar_select %p38, %s39, %s40
      %p44 = pneg %p38
      %p45 = scmp.eq.s32.totalorder %s17, 1
      %p46 = por %p44, %p45
      %p47 = scmp.ne.s32.totalorder %s39, %s42
      %p48 = scmp.eq.s32.totalorder %s17, 0
      %p49 = por %p47, %p48
      %p50 = scmp.ne.s32.totalorder %s39, %s42
      %p51 = scmp.eq.s32.totalorder %s22, 1
      %p52 = por %p50, %p51
      %p53 = scmp.ne.s32.totalorder %s42, %s43
      %p54 = scmp.eq.s32.totalorder %s22, 0
      %p55 = por %p53, %p54
      %p56 = scmp.ne.s32.totalorder %s42, %s43
      %p57 = scmp.eq.s32.totalorder %s23, 1
      %p58 = por %p56, %p57
      %p60 = scmp.ne.s32.totalorder %s43, %s59
      %p61 = scmp.eq.s32.totalorder %s23, 0
      %p62 = por %p60, %p61
      %s63 = ssub.s32 %s24, %s36
      %p64 = scmp.eq.s32.totalorder %s63, 0
      %s66 = sadd.s32 %s65, 1
      %s67 = scalar_select %p64, %s65, %s66
      %p70 = pneg %p64
      %p71 = scmp.eq.s32.totalorder %s17, 1
      %p72 = por %p70, %p71
      %p73 = scmp.ne.s32.totalorder %s65, %s68
      %p74 = scmp.eq.s32.totalorder %s17, 0
      %p75 = por %p73, %p74
      %p76 = scmp.ne.s32.totalorder %s65, %s68
      %p77 = scmp.eq.s32.totalorder %s22, 1
      %p78 = por %p76, %p77
      %p79 = scmp.ne.s32.totalorder %s68, %s69
      %p80 = scmp.eq.s32.totalorder %s22, 0
      %p81 = por %p79, %p80
      %p82 = scmp.ne.s32.totalorder %s68, %s69
      %p83 = scmp.eq.s32.totalorder %s23, 1
      %p84 = por %p82, %p83
      %p86 = scmp.ne.s32.totalorder %s69, %s85
      %p87 = scmp.eq.s32.totalorder %s23, 0
      %p88 = por %p86, %p87
      %s90 = sadd.s32 %s89, 1
      %p93 = scmp.eq.s32.totalorder %s17, 1
      %p94 = scmp.ne.s32.totalorder %s89, %s91
      %p95 = scmp.eq.s32.totalorder %s17, 0
      %p96 = por %p94, %p95
      %p97 = scmp.ne.s32.totalorder %s89, %s91
      %p98 = scmp.eq.s32.totalorder %s22, 1
      %p99 = por %p97, %p98
      %p100 = scmp.ne.s32.totalorder %s91, %s92
      %p101 = scmp.eq.s32.totalorder %s22, 0
      %p102 = por %p100, %p101
      %p103 = scmp.ne.s32.totalorder %s91, %s92
      %p104 = scmp.eq.s32.totalorder %s23, 1
      %p105 = por %p103, %p104
      %p107 = scmp.ne.s32.totalorder %s92, %s106
      %p108 = scmp.eq.s32.totalorder %s23, 0
      %p109 = por %p107, %p108
      %s111 = sadd.s32 %s110, 1
      %p114 = scmp.eq.s32.totalorder %s17, 1
      %p115 = scmp.ne.s32.totalorder %s110, %s112
      %p116 = scmp.eq.s32.totalorder %s17, 0
      %p117 = por %p115, %p116
      %p118 = scmp.ne.s32.totalorder %s110, %s112
      %p119 = scmp.eq.s32.totalorder %s22, 1
      %p120 = por %p118, %p119
      %p121 = scmp.ne.s32.totalorder %s112, %s113
      %p122 = scmp.eq.s32.totalorder %s22, 0
      %p123 = por %p121, %p122
      %p124 = scmp.ne.s32.totalorder %s112, %s113
      %p125 = scmp.eq.s32.totalorder %s23, 1
      %p126 = por %p124, %p125
      %p128 = scmp.ne.s32.totalorder %s113, %s127
      %p129 = scmp.eq.s32.totalorder %s23, 0
      %p130 = por %p128, %p129
      %s131 = ssub.s32 %s24, %s36
      %s132 = ssub.s32 %s25, %s32
      %s133 = sor.u32 %s131, %s132
      %p134 = scmp.eq.s32.totalorder %s133, 0
      %s136 = sadd.s32 %s135, 1
      %s137 = scalar_select %p134, %s135, %s136
      %p140 = pneg %p134
      %p141 = scmp.eq.s32.totalorder %s17, 1
      %p142 = por %p140, %p141
      %p143 = scmp.ne.s32.totalorder %s135, %s138
      %p144 = scmp.eq.s32.totalorder %s17, 0
      %p145 = por %p143, %p144
      %p146 = scmp.ne.s32.totalorder %s135, %s138
      %p147 = scmp.eq.s32.totalorder %s22, 1
      %p148 = por %p146, %p147
      %p149 = scmp.ne.s32.totalorder %s138, %s139
      %p150 = scmp.eq.s32.totalorder %s22, 0
      %p151 = por %p149, %p150
      %p152 = scmp.ne.s32.totalorder %s138, %s139
      %p153 = scmp.eq.s32.totalorder %s23, 1
      %p154 = por %p152, %p153
      %p156 = scmp.ne.s32.totalorder %s139, %s155
      %p157 = scmp.eq.s32.totalorder %s23, 0
      %p158 = por %p156, %p157
      %p159 = scmp.le.s32.totalorder 1, %s17
      %p160 = scmp.lt.s32.totalorder %s17, 3
      %p161 = pnand %p159, %p160
      %p162 = pneg %p161
      // Predicated region
      $region9: #{tpu_custom_call.1} parent=5 // pred_check
        _
      $region10: #{tpu_custom_call.1} parent=5 // pred_check_branch
        %164 = sbr.rel (%p161) target = $region12
      $region11: #{tpu_custom_call.1} parent=5 // pred_region
        %s165 = ssub.s32 %s17, 1
        // Predicated region
        $region13: #{tpu_custom_call.1} parent=11 // pred_check
          %p166 = pneg %p55
        $region14: #{tpu_custom_call.1} parent=11 // pred_check_branch
          %168 = sbr.rel (%p166) target = $region16
        $region15: #{tpu_custom_call.1} parent=11 // pred_region
          %s169 = smul.u32 4, %s27
          %s171 = ssub.s32 256, 256
          %172 = vsyncadd [#allocation4], %s171
          %s173 = smul.addr %s169, 64
          %s174 = scalar_lea.hbm %s0, %s173
          %s175 = sshll.u32 [#allocation3], 4
          %s176 = int_to_ptr.vmem [resolvable:$true] %s175
          %181 = dma.hbm_to_vmem [thread:$0]  %s174, 256, %s176, [#allocation4], 64, 64, 4
        $region16: #{tpu_custom_call.1} parent=11 // pred_fallthru
          _
        // Predicated region
        $region17: #{tpu_custom_call.1} parent=11 // pred_check
          %p182 = pneg %p102
        $region18: #{tpu_custom_call.1} parent=11 // pred_check_branch
          %184 = sbr.rel (%p182) target = $region20
        $region19: #{tpu_custom_call.1} parent=11 // pred_region
          %s186 = ssub.s32 3072, 3072
          %187 = vsyncadd [#allocation7], %s186
          %s188 = sshll.u32 [#allocation8], 4
          %s189 = int_to_ptr.vmem [resolvable:$true] %s188
          %194 = dma.hbm_to_vmem [thread:$0]  %s2, 3072, %s189, [#allocation7], 128, 128, 8
        $region20: #{tpu_custom_call.1} parent=11 // pred_fallthru
          _
        // Predicated region
        $region21: #{tpu_custom_call.1} parent=11 // pred_check
          %p195 = pneg %p123
        $region22: #{tpu_custom_call.1} parent=11 // pred_check_branch
          %197 = sbr.rel (%p195) target = $region24
        $region23: #{tpu_custom_call.1} parent=11 // pred_region
          _
        $region24: #{tpu_custom_call.1} parent=11 // pred_fallthru
          _
      $region12: #{tpu_custom_call.1} parent=5 // pred_fallthru
        _
      %p198 = scmp.lt.s32.totalorder %s17, 2
      // Predicated region
      $region25: #{tpu_custom_call.1} parent=5 // pred_check
        %p199 = pneg %p198
      $region26: #{tpu_custom_call.1} parent=5 // pred_check_branch
        %201 = sbr.rel (%p199) target = $region28
      $region27: #{tpu_custom_call.1} parent=5 // pred_region
        // Predicated region
        $region29: #{tpu_custom_call.1} parent=27 // pred_check
          %p202 = pneg %p75
        $region30: #{tpu_custom_call.1} parent=27 // pred_check_branch
          %204 = sbr.rel (%p202) target = $region32
        $region31: #{tpu_custom_call.1} parent=27 // pred_region
          %s205 = sand.u32 %s17, 1
          %s206 = scalar_lea.sflag [#allocation7], %s205
          %s207 = sand.u32 %s65, 1
          %s208 = smul.addr %s207, 8
          %s209 = scalar_lea.vmem [#allocation6], %s208
          %s211 = ssub.s32 128, 128
          %212 = vsyncadd %s206, %s211
          %s213 = smul.addr %s24, 2
          %s214 = smul.addr %s213, 64
          %s215 = scalar_lea.hbm %s1, %s214
          %s216 = sshll.u32 %s209, 4
          %s217 = int_to_ptr.vmem [resolvable:$true] %s216
          %222 = dma.hbm_to_vmem [thread:$0]  %s215, 128, %s217, %s206, 64, 64, 4
        $region32: #{tpu_custom_call.1} parent=27 // pred_fallthru
          _
      $region28: #{tpu_custom_call.1} parent=5 // pred_fallthru
        _
      %p223 = scmp.le.s32.totalorder 1, %s17
      %p224 = scmp.lt.s32.totalorder %s17, 3
      %p225 = pnand %p223, %p224
      %p226 = pneg %p225
      // Predicated region
      $region33: #{tpu_custom_call.1} parent=5 // pred_check
        _
      $region34: #{tpu_custom_call.1} parent=5 // pred_check_branch
        %228 = sbr.rel (%p225) target = $region36
      $region35: #{tpu_custom_call.1} parent=5 // pred_region
        %s229 = ssub.s32 %s17, 1
        // Predicated region
        $region37: #{tpu_custom_call.1} parent=35 // pred_check
          %p230 = pneg %p55
        $region38: #{tpu_custom_call.1} parent=35 // pred_check_branch
          %232 = sbr.rel (%p230) target = $region40
        $region39: #{tpu_custom_call.1} parent=35 // pred_region
          %233 = dma.done [#allocation4], 256
        $region40: #{tpu_custom_call.1} parent=35 // pred_fallthru
          _
        %s234 = sand.u32 %s22, 1
        %s235 = scalar_lea.sflag [#allocation7], %s234
        %s236 = sand.u32 %s68, 1
        %s237 = smul.addr %s236, 8
        %s238 = scalar_lea.vmem [#allocation6], %s237
        // Predicated region
        $region41: #{tpu_custom_call.1} parent=35 // pred_check
          %p239 = pneg %p81
        $region42: #{tpu_custom_call.1} parent=35 // pred_check_branch
          %241 = sbr.rel (%p239) target = $region44
        $region43: #{tpu_custom_call.1} parent=35 // pred_region
          %242 = dma.done %s235, 128
        $region44: #{tpu_custom_call.1} parent=35 // pred_fallthru
          _
        // Predicated region
        $region45: #{tpu_custom_call.1} parent=35 // pred_check
          %p243 = pneg %p102
        $region46: #{tpu_custom_call.1} parent=35 // pred_check_branch
          %245 = sbr.rel (%p243) target = $region48
        $region47: #{tpu_custom_call.1} parent=35 // pred_region
          %246 = dma.done [#allocation7], 3072
        $region48: #{tpu_custom_call.1} parent=35 // pred_fallthru
          _
        %p247 = pneg %p55
        %p248 = pneg %p52
        %s249 = sand.u32 %s22, 1
        %s250 = scalar_lea.sflag [#allocation7], %s249
        %s251 = sand.u32 %s68, 1
        %s252 = smul.addr %s251, 8
        %s253 = scalar_lea.vmem [#allocation6], %s252
        %p254 = pneg %p81
        %p255 = pneg %p78
        %p256 = pneg %p102
        %p257 = pneg %p99
        %p258 = pneg %p123
        %p259 = pneg %p120
        %p260 = pneg %p151
        %p261 = pneg %p148
        %s262 = sand.u32 %s138, 1
        %s263 = scalar_lea.sflag [#allocation5], %s262
        %s264 = sand.u32 %s138, 1
        %s265 = smul.addr %s264, 64
        %s266 = scalar_lea.vmem [#allocation9], %s265
        %s267 = smul.u32 4, %s27
        %s268 = smul.u32 4, %s27
        %p270 = scmp.eq.s32.totalorder %s27, 0
        // Predicated region
        $region49: #{tpu_custom_call.1} parent=35 // pred_check
          %p271 = pneg %p270
        $region50: #{tpu_custom_call.1} parent=35 // pred_check_branch
          %273 = sbr.rel (%p271) target = $region52
        $region51: #{tpu_custom_call.1} parent=35 // pred_region
          %v274 = vld [vmem:[%s238] sm:$0xf]
          %v275 = vld [vmem:[%s238 + $0x4] sm:$0xf]
          %v276 = vld [vmem:[#allocation8] sm:$0xff]
          %v277 = vld [vmem:[#allocation8 + $0x8] sm:$0xff]
          %v278 = vld [vmem:[#allocation8 + $0x10] sm:$0xff]
          %v279 = vld [vmem:[#allocation8 + $0x18] sm:$0xff]
          %v280 = vld [vmem:[#allocation8 + $0x20] sm:$0xff]
          %v281 = vld [vmem:[#allocation8 + $0x28] sm:$0xff]
          %v282 = vld [vmem:[#allocation8 + $0x30] sm:$0xff]
          %v283 = vld [vmem:[#allocation8 + $0x38] sm:$0xff]
          %v286 = vunpack.c.l.b16 %v274
          %v287 = vunpack.c.l.b16 %v275
          %v288 = vpack.c.b16 %v287, %v286
          %v297 = vunpack.c.l.b16 %v276
          %v298 = vunpack.c.h.b16 %v276
          %v299 = vunpack.c.l.b16 %v277
          %v300 = vunpack.c.h.b16 %v277
          %v301 = vunpack.c.l.b16 %v278
          %v302 = vunpack.c.h.b16 %v278
          %v303 = vunpack.c.l.b16 %v279
          %v304 = vunpack.c.h.b16 %v279
          %v305 = vunpack.c.l.b16 %v280
          %v306 = vunpack.c.h.b16 %v280
          %v307 = vunpack.c.l.b16 %v281
          %v308 = vunpack.c.h.b16 %v281
          %v309 = vunpack.c.l.b16 %v282
          %v310 = vunpack.c.h.b16 %v282
          %v311 = vunpack.c.l.b16 %v283
          %v312 = vunpack.c.h.b16 %v283
          %v313 = vpack.c.b16 %v299, %v297
          %v314 = vpack.c.b16 %v300, %v298
          %v315 = vpack.c.b16 %v303, %v301
          %v316 = vpack.c.b16 %v304, %v302
          %v317 = vpack.c.b16 %v307, %v305
          %v318 = vpack.c.b16 %v308, %v306
          %v319 = vpack.c.b16 %v311, %v309
          %v320 = vpack.c.b16 %v312, %v310
          %vm329 = vcmask 523264
          %v331 = vsel %vm329, %v288, 0
          %333 = vmatprep.subr.bf16.mxu0 %v314
          %334 = vmatpush1.bf16.msra.mxu0 %v313
          %335 = vmatprep.subr.bf16.mxu0 %v316
          %336 = vmatpush1.bf16.msra.mxu0 %v315
          %337 = vmatprep.subr.bf16.mxu0 %v318
          %338 = vmatpush1.bf16.msra.mxu0 %v317
          %339 = vmatprep.subr.bf16.mxu0 %v320
          %340 = vmatpush1.bf16.msra.mxu0 %v319
          %341 = vmatprep.subr.bf16.mxu0 0
          %342 = vmatpush1.bf16.msra.mxu0 0
          %343 = vmatprep.subr.bf16.mxu0 0
          %344 = vmatpush1.bf16.msra.mxu0 0
          %345 = vmatprep.subr.bf16.mxu0 0
          %346 = vmatpush1.bf16.msra.mxu0 0
          %347 = vmatprep.subr.bf16.mxu0 0
          %348 = vmatpush1.bf16.msra.mxu0 0
          %349 = vmatprep.subr.bf16.mxu0 0
          %350 = vmatpush1.bf16.msra.mxu0 0
          %351 = vmatprep.subr.bf16.mxu0 0
          %352 = vmatpush1.bf16.msra.mxu0 0
          %353 = vmatprep.subr.bf16.mxu0 0
          %354 = vmatpush1.bf16.msra.mxu0 0
          %355 = vmatprep.subr.bf16.mxu0 0
          %356 = vmatpush1.bf16.msra.mxu0 0
          %357 = vmatprep.subr.bf16.mxu0 0
          %358 = vmatpush1.bf16.msra.mxu0 0
          %359 = vmatprep.subr.bf16.mxu0 0
          %360 = vmatpush1.bf16.msra.mxu0 0
          %361 = vmatprep.subr.bf16.mxu0 0
          %362 = vmatpush1.bf16.msra.mxu0 0
          %363 = vmatprep.subr.bf16.mxu0 0
          %364 = vmatpush1.bf16.msra.mxu0 0
          %365 = vmatprep.mubr.bf16.mxu0 0
          %366 = vmatmul.mubr.bf16.gmra.mrb[0].mxu0 %v331
          %v367 = vpop.f32.mrb[0].mxu0
          %v368 = vadd.f32 0.0, %v367
          %v369 = vpop.f32.mrb[0].mxu0
          %v370 = vadd.f32 0.0, %v369
          %v371 = vpop.f32.mrb[0].mxu0
          %v372 = vadd.f32 0.0, %v371
          %v373 = vpop.f32.mrb[0].mxu0
          %v374 = vadd.f32 0.0, %v373
          %375 = vdwg.mxu0
          %v376 = vpack.c.bf16 %v372, %v368
          %v377 = vpack.c.bf16 %v374, %v370
          %378 = vst [vmem:[#allocation2] sm:$0xff] %v376
          %379 = vst [vmem:[#allocation2 + $0x8] sm:$0xff] %v377
          %s380 = scalar_lea.vmem [#allocation8], 64
          %v381 = vld [vmem:[%s380] sm:$0xff]
          %v382 = vld [vmem:[%s380 + $0x8] sm:$0xff]
          %v383 = vld [vmem:[%s380 + $0x10] sm:$0xff]
          %v384 = vld [vmem:[%s380 + $0x18] sm:$0xff]
          %v385 = vld [vmem:[%s380 + $0x20] sm:$0xff]
          %v386 = vld [vmem:[%s380 + $0x28] sm:$0xff]
          %v387 = vld [vmem:[%s380 + $0x30] sm:$0xff]
          %v388 = vld [vmem:[%s380 + $0x38] sm:$0xff]
          %v397 = vunpack.c.l.b16 %v381
          %v398 = vunpack.c.h.b16 %v381
          %v399 = vunpack.c.l.b16 %v382
          %v400 = vunpack.c.h.b16 %v382
          %v401 = vunpack.c.l.b16 %v383
          %v402 = vunpack.c.h.b16 %v383
          %v403 = vunpack.c.l.b16 %v384
          %v404 = vunpack.c.h.b16 %v384
          %v405 = vunpack.c.l.b16 %v385
          %v406 = vunpack.c.h.b16 %v385
          %v407 = vunpack.c.l.b16 %v386
          %v408 = vunpack.c.h.b16 %v386
          %v409 = vunpack.c.l.b16 %v387
          %v410 = vunpack.c.h.b16 %v387
          %v411 = vunpack.c.l.b16 %v388
          %v412 = vunpack.c.h.b16 %v388
          %v413 = vpack.c.b16 %v399, %v397
          %v414 = vpack.c.b16 %v400, %v398
          %v415 = vpack.c.b16 %v403, %v401
          %v416 = vpack.c.b16 %v404, %v402
          %v417 = vpack.c.b16 %v407, %v405
          %v418 = vpack.c.b16 %v408, %v406
          %v419 = vpack.c.b16 %v411, %v409
          %v420 = vpack.c.b16 %v412, %v410
          %429 = vmatprep.subr.bf16.mxu0 %v414
          %430 = vmatpush1.bf16.msra.mxu0 %v413
          %431 = vmatprep.subr.bf16.mxu0 %v416
          %432 = vmatpush1.bf16.msra.mxu0 %v415
          %433 = vmatprep.subr.bf16.mxu0 %v418
          %434 = vmatpush1.bf16.msra.mxu0 %v417
          %435 = vmatprep.subr.bf16.mxu0 %v420
          %436 = vmatpush1.bf16.msra.mxu0 %v419
          %437 = vmatprep.subr.bf16.mxu0 0
          %438 = vmatpush1.bf16.msra.mxu0 0
          %439 = vmatprep.subr.bf16.mxu0 0
          %440 = vmatpush1.bf16.msra.mxu0 0
          %441 = vmatprep.subr.bf16.mxu0 0
          %442 = vmatpush1.bf16.msra.mxu0 0
          %443 = vmatprep.subr.bf16.mxu0 0
          %444 = vmatpush1.bf16.msra.mxu0 0
          %445 = vmatprep.subr.bf16.mxu0 0
          %446 = vmatpush1.bf16.msra.mxu0 0
          %447 = vmatprep.subr.bf16.mxu0 0
          %448 = vmatpush1.bf16.msra.mxu0 0
          %449 = vmatprep.subr.bf16.mxu0 0
          %450 = vmatpush1.bf16.msra.mxu0 0
          %451 = vmatprep.subr.bf16.mxu0 0
          %452 = vmatpush1.bf16.msra.mxu0 0
          %453 = vmatprep.subr.bf16.mxu0 0
          %454 = vmatpush1.bf16.msra.mxu0 0
          %455 = vmatprep.subr.bf16.mxu0 0
          %456 = vmatpush1.bf16.msra.mxu0 0
          %457 = vmatprep.subr.bf16.mxu0 0
          %458 = vmatpush1.bf16.msra.mxu0 0
          %459 = vmatprep.subr.bf16.mxu0 0
          %460 = vmatpush1.bf16.msra.mxu0 0
          %461 = vmatprep.mubr.bf16.mxu0 0
          %462 = vmatmul.mubr.bf16.gmra.mrb[0].mxu0 %v331
          %v463 = vpop.f32.mrb[0].mxu0
          %v464 = vadd.f32 0.0, %v463
          %v465 = vpop.f32.mrb[0].mxu0
          %v466 = vadd.f32 0.0, %v465
          %v467 = vpop.f32.mrb[0].mxu0
          %v468 = vadd.f32 0.0, %v467
          %v469 = vpop.f32.mrb[0].mxu0
          %v470 = vadd.f32 0.0, %v469
          %471 = vdwg.mxu0
          %v472 = vpack.c.bf16 %v468, %v464
          %v473 = vpack.c.bf16 %v470, %v466
          %474 = vst [vmem:[#allocation2 + $0x10] sm:$0xff] %v472
          %475 = vst [vmem:[#allocation2 + $0x18] sm:$0xff] %v473
          %s476 = scalar_lea.vmem [#allocation8], 128
          %v477 = vld [vmem:[%s476] sm:$0xff]
          %v478 = vld [vmem:[%s476 + $0x8] sm:$0xff]
          %v479 = vld [vmem:[%s476 + $0x10] sm:$0xff]
          %v480 = vld [vmem:[%s476 + $0x18] sm:$0xff]
          %v481 = vld [vmem:[%s476 + $0x20] sm:$0xff]
          %v482 = vld [vmem:[%s476 + $0x28] sm:$0xff]
          %v483 = vld [vmem:[%s476 + $0x30] sm:$0xff]
          %v484 = vld [vmem:[%s476 + $0x38] sm:$0xff]
          %v493 = vunpack.c.l.b16 %v477
          %v494 = vunpack.c.h.b16 %v477
          %v495 = vunpack.c.l.b16 %v478
          %v496 = vunpack.c.h.b16 %v478
          %v497 = vunpack.c.l.b16 %v479
          %v498 = vunpack.c.h.b16 %v479
          %v499 = vunpack.c.l.b16 %v480
          %v500 = vunpack.c.h.b16 %v480
          %v501 = vunpack.c.l.b16 %v481
          %v502 = vunpack.c.h.b16 %v481
          %v503 = vunpack.c.l.b16 %v482
          %v504 = vunpack.c.h.b16 %v482
          %v505 = vunpack.c.l.b16 %v483
          %v506 = vunpack.c.h.b16 %v483
          %v507 = vunpack.c.l.b16 %v484
          %v508 = vunpack.c.h.b16 %v484
          %v509 = vpack.c.b16 %v495, %v493
          %v510 = vpack.c.b16 %v496, %v494
          %v511 = vpack.c.b16 %v499, %v497
          %v512 = vpack.c.b16 %v500, %v498
          %v513 = vpack.c.b16 %v503, %v501
          %v514 = vpack.c.b16 %v504, %v502
          %v515 = vpack.c.b16 %v507, %v505
          %v516 = vpack.c.b16 %v508, %v506
          %525 = vmatprep.subr.bf16.mxu0 %v510
          %526 = vmatpush1.bf16.msra.mxu0 %v509
          %527 = vmatprep.subr.bf16.mxu0 %v512
          %528 = vmatpush1.bf16.msra.mxu0 %v511
          %529 = vmatprep.subr.bf16.mxu0 %v514
          %530 = vmatpush1.bf16.msra.mxu0 %v513
          %531 = vmatprep.subr.bf16.mxu0 %v516
          %532 = vmatpush1.bf16.msra.mxu0 %v515
          %533 = vmatprep.subr.bf16.mxu0 0
          %534 = vmatpush1.bf16.msra.mxu0 0
          %535 = vmatprep.subr.bf16.mxu0 0
          %536 = vmatpush1.bf16.msra.mxu0 0
          %537 = vmatprep.subr.bf16.mxu0 0
          %538 = vmatpush1.bf16.msra.mxu0 0
          %539 = vmatprep.subr.bf16.mxu0 0
          %540 = vmatpush1.bf16.msra.mxu0 0
          %541 = vmatprep.subr.bf16.mxu0 0
          %542 = vmatpush1.bf16.msra.mxu0 0
          %543 = vmatprep.subr.bf16.mxu0 0
          %544 = vmatpush1.bf16.msra.mxu0 0
          %545 = vmatprep.subr.bf16.mxu0 0
          %546 = vmatpush1.bf16.msra.mxu0 0
          %547 = vmatprep.subr.bf16.mxu0 0
          %548 = vmatpush1.bf16.msra.mxu0 0
          %549 = vmatprep.subr.bf16.mxu0 0
          %550 = vmatpush1.bf16.msra.mxu0 0
          %551 = vmatprep.subr.bf16.mxu0 0
          %552 = vmatpush1.bf16.msra.mxu0 0
          %553 = vmatprep.subr.bf16.mxu0 0
          %554 = vmatpush1.bf16.msra.mxu0 0
          %555 = vmatprep.subr.bf16.mxu0 0
          %556 = vmatpush1.bf16.msra.mxu0 0
          %557 = vmatprep.mubr.bf16.mxu0 0
          %558 = vmatmul.mubr.bf16.gmra.mrb[0].mxu0 %v331
          %v559 = vpop.f32.mrb[0].mxu0
          %v560 = vadd.f32 0.0, %v559
          %v561 = vpop.f32.mrb[0].mxu0
          %v562 = vadd.f32 0.0, %v561
          %v563 = vpop.f32.mrb[0].mxu0
          %v564 = vadd.f32 0.0, %v563
          %v565 = vpop.f32.mrb[0].mxu0
          %v566 = vadd.f32 0.0, %v565
          %567 = vdwg.mxu0
          %v568 = vpack.c.bf16 %v564, %v560
          %v569 = vpack.c.bf16 %v566, %v562
          %570 = vst [vmem:[#allocation2 + $0x20] sm:$0xff] %v568
          %571 = vst [vmem:[#allocation2 + $0x28] sm:$0xff] %v569
        $region52: #{tpu_custom_call.1} parent=35 // pred_fallthru
          _
        %v572 = vld [vmem:[#allocation3] sm:$0xf]
        %v573 = vld [vmem:[#allocation3 + $0x4] sm:$0xf]
        %v574 = vld [vmem:[#allocation3 + $0x8] sm:$0xf]
        %v575 = vld [vmem:[#allocation3 + $0xc] sm:$0xf]
        %v576 = vld [vmem:[#allocation2] sm:$0xff]
        %v577 = vld [vmem:[#allocation2 + $0x8] sm:$0xff]
        %v578 = vld [vmem:[#allocation2 + $0x10] sm:$0xff]
        %v579 = vld [vmem:[#allocation2 + $0x18] sm:$0xff]
        %v580 = vld [vmem:[#allocation2 + $0x20] sm:$0xff]
        %v581 = vld [vmem:[#allocation2 + $0x28] sm:$0xff]
        %v582 = vld [vmem:[%s3] sm:$0x3]
        %v584 = vlaneseq
        %v585 = vshrl.u32 %v584, 7
        %v586 = vsub.s32 0, %v585
        %v587 = vrot.slane %v582, %v586
        %v588 = vlaneseq
        %v589 = vshrl.u32 %v588, 7
        %v590 = vsub.s32 1, %v589
        %v591 = vrot.slane %v582, %v590
        %v598 = vunpack.c.l.b16 %v572
        %v599 = vunpack.c.l.b16 %v573
        %v600 = vunpack.c.l.b16 %v574
        %v601 = vunpack.c.l.b16 %v575
        %v602 = vpack.c.b16 %v599, %v598
        %v603 = vpack.c.b16 %v601, %v600
        %vm604 = vcmask 392192
        %v606 = vsel %vm604, %v602, 0
        %v609 = vsel %vm604, %v603, 0
        %611 = vmatprep.subr.bf16.mxu0 %v577
        %612 = vmatpush1.bf16.msra.mxu0 %v576
        %613 = vmatprep.subr.bf16.mxu0 %v579
        %614 = vmatpush1.bf16.msra.mxu0 %v578
        %615 = vmatprep.subr.bf16.mxu0 %v581
        %616 = vmatpush1.bf16.msra.mxu0 %v580
        %617 = vmatprep.subr.bf16.mxu0 0
        %618 = vmatpush1.bf16.msra.mxu0 0
        %619 = vmatprep.subr.bf16.mxu0 0
        %620 = vmatpush1.bf16.msra.mxu0 0
        %621 = vmatprep.subr.bf16.mxu0 0
        %622 = vmatpush1.bf16.msra.mxu0 0
        %623 = vmatprep.subr.bf16.mxu0 0
        %624 = vmatpush1.bf16.msra.mxu0 0
        %625 = vmatprep.subr.bf16.mxu0 0
        %626 = vmatpush1.bf16.msra.mxu0 0
        %627 = vmatprep.subr.bf16.mxu0 0
        %628 = vmatpush1.bf16.msra.mxu0 0
        %629 = vmatprep.subr.bf16.mxu0 0
        %630 = vmatpush1.bf16.msra.mxu0 0
        %631 = vmatprep.subr.bf16.mxu0 0
        %632 = vmatpush1.bf16.msra.mxu0 0
        %633 = vmatprep.subr.bf16.mxu0 0
        %634 = vmatpush1.bf16.msra.mxu0 0
        %635 = vmatprep.subr.bf16.mxu0 0
        %636 = vmatpush1.bf16.msra.mxu0 0
        %637 = vmatprep.subr.bf16.mxu0 0
        %638 = vmatpush1.bf16.msra.mxu0 0
        %639 = vmatprep.subr.bf16.mxu0 0
        %640 = vmatpush1.bf16.msra.mxu0 0
        %641 = vmatprep.subr.bf16.mxu0 0
        %642 = vmatpush1.bf16.msra.mxu0 0
        %643 = vmatprep.mubr.bf16.mxu0 0
        %644 = vmatmul.mubr.bf16.gmra.mrb[0].mxu0 %v606
        %v645 = vpop.f32.mrb[0].mxu0
        %v646 = vadd.f32 %v587, %v645
        %v647 = vpop.f32.mrb[0].mxu0
        %v648 = vadd.f32 %v591, %v647
        %v649 = vpop.f32.mrb[0].mxu0
        %v650 = vadd.f32 %v587, %v649
        %v651 = vpop.f32.mrb[0].mxu0
        %v652 = vadd.f32 %v591, %v651
        %653 = vmatprep.mubr.bf16.mxu0 0
        %654 = vmatmul.mubr.bf16.gmra.mrb[0].mxu0 %v609
        %v655 = vpop.f32.mrb[0].mxu0
        %v656 = vadd.f32 %v587, %v655
        %v657 = vpop.f32.mrb[0].mxu0
        %v658 = vadd.f32 %v591, %v657
        %v659 = vpop.f32.mrb[0].mxu0
        %v660 = vadd.f32 %v587, %v659
        %v661 = vpop.f32.mrb[0].mxu0
        %v662 = vadd.f32 %v591, %v661
        %663 = vdwg.mxu0
        %664 = vst [vmem:[%s266] sm:$0xff] %v646
        %665 = vst [vmem:[%s266 + $0x8] sm:$0xff] %v648
        %666 = vst [vmem:[%s266 + $0x10] sm:$0xff] %v650
        %667 = vst [vmem:[%s266 + $0x18] sm:$0xff] %v652
        %668 = vst [vmem:[%s266 + $0x20] sm:$0xff] %v656
        %669 = vst [vmem:[%s266 + $0x28] sm:$0xff] %v658
        %670 = vst [vmem:[%s266 + $0x30] sm:$0xff] %v660
        %671 = vst [vmem:[%s266 + $0x38] sm:$0xff] %v662
        %s672 = sand.u32 %s138, 1
        %s673 = scalar_lea.sflag [#allocation5], %s672
        %s674 = sand.u32 %s138, 1
        %s675 = smul.addr %s674, 64
        %s676 = scalar_lea.vmem [#allocation9], %s675
        // Predicated region
        $region53: #{tpu_custom_call.1} parent=35 // pred_check
          %p677 = pneg %p148
        $region54: #{tpu_custom_call.1} parent=35 // pred_check_branch
          %679 = sbr.rel (%p677) target = $region56
        $region55: #{tpu_custom_call.1} parent=35 // pred_region
          %s680 = smul.u32 4, %s27
          %s682 = ssub.s32 1024, 1024
          %683 = vsyncadd %s673, %s682
          %s684 = smul.addr %s680, 2
          %s685 = smul.addr %s26, 8
          %s686 = sadd.s32 %s684, %s685
          %s687 = smul.addr %s686, 128
          %s688 = scalar_lea.hbm %s4, %s687
          %s689 = sshll.u32 %s676, 4
          %s690 = int_to_ptr.vmem [resolvable:$true] %s689
          %695 = dma.vmem_to_hbm [thread:$0]  %s690, 1024, %s688, %s673, 256, 256, 16
        $region56: #{tpu_custom_call.1} parent=35 // pred_fallthru
          _
      $region36: #{tpu_custom_call.1} parent=5 // pred_fallthru
        _
      %p696 = scmp.le.s32.totalorder 2, %s17
      // Predicated region
      $region57: #{tpu_custom_call.1} parent=5 // pred_check
        %p697 = pneg %p696
      $region58: #{tpu_custom_call.1} parent=5 // pred_check_branch
        %699 = sbr.rel (%p697) target = $region60
      $region59: #{tpu_custom_call.1} parent=5 // pred_region
        %s700 = ssub.s32 %s17, 2
        // Predicated region
        $region61: #{tpu_custom_call.1} parent=59 // pred_check
          %p701 = pneg %p154
        $region62: #{tpu_custom_call.1} parent=59 // pred_check_branch
          %703 = sbr.rel (%p701) target = $region64
        $region63: #{tpu_custom_call.1} parent=59 // pred_region
          %s704 = sand.u32 %s139, 1
          %s705 = scalar_lea.sflag [#allocation5], %s704
          %s706 = sand.u32 %s139, 1
          %s707 = smul.addr %s706, 64
          %s708 = scalar_lea.vmem [#allocation9], %s707
          %709 = dma.done %s705, 1024
        $region64: #{tpu_custom_call.1} parent=59 // pred_fallthru
          _
      $region60: #{tpu_custom_call.1} parent=5 // pred_fallthru
        _
    $region6: #{tpu_custom_call.1} parent=1 // loop_footer
      %s21 = sadd.s32 1, %s17
    $region7: #{tpu_custom_call.1} parent=1 // loop_footer_branch
      %16 = sbr.rel target = $region3
    $region8: #{tpu_custom_call.1} parent=1 // loop_exit
      _
    %710 = vsyncpa [#allocation4], 1
    %s711 = scalar_lea.sflag [#allocation4], 1
    %712 = vsyncpa %s711, 1
    %713 = vsyncpa [#allocation7], 1
    %s714 = scalar_lea.sflag [#allocation7], 1
    %715 = vsyncpa %s714, 1
    %716 = vsyncpa [#allocation5], 1
    %s717 = scalar_lea.sflag [#allocation5], 1
    %718 = vsyncpa %s717, 1

</llo_original>
